<compile_context>
chip_gen: v7x
topology: tpu7x:2x2x1
jax: 0.10.0
libtpu: 0.0.40
codegen_flags: <defaults>
</compile_context>

<pallas_src>
import jax
import jax.numpy as jnp
from jax.experimental import pallas as pl
from jax.experimental.pallas import tpu as pltpu

# Synthetic hyperparameters implied by the module (CartPole-style DQN).
N_STATES = 4
N_ACTIONS = 2
HIDDEN = 50

# Lane-tile cap: x block = 4 * 8192 * 4 B = 128 KiB, out block = 64 KiB; even
# double-buffered this is far under the scoped-VMEM default on every gen.
TB_MAX = 8192
# Aim for ~8 grid steps on large batches (>=4 per TensorCore on v7x).
TARGET_STEPS = 8


def _round_up(x, m):
    return (x + m - 1) // m * m


def _choose_tb(B):
    """Batch (lane) tile.

    Full extent when B < 128 (always a legal block shape); otherwise a
    multiple of 128 sized for ~TARGET_STEPS grid steps, capped at TB_MAX.
    """
    if B <= 128:
        return B
    tb = _round_up(-(-B // TARGET_STEPS), 128)
    return int(max(128, min(TB_MAX, tb)))


def _dqn_kernel(x_ref, w1_ref, b1_ref, w2_ref, b2_ref, out_ref):
    x = x_ref[...]        # (N_STATES, tb) f32, batch on lanes
    w1 = w1_ref[...]      # (HIDDEN, N_STATES)  -- native PyTorch layout
    tb = x.shape[1]

    # fc1 on the VPU: K=4 broadcast-FMAs. x[k:k+1, :] broadcasts across
    # sublanes (the cheap direction in this layout); an MXU pass at K=4 would
    # use <2% of the array and buy nothing.
    h = jnp.broadcast_to(b1_ref[...], (HIDDEN, tb))           # (HIDDEN, tb)
    for k in range(N_STATES):                                 # static K=4
        h = h + w1[:, k:k + 1] * x[k:k + 1, :]
    h = jnp.maximum(h, 0.0)                                   # ReLU (VPU)

    # fc2 on the (otherwise idle) MXU: (N_ACTIONS, HIDDEN) @ (HIDDEN, tb).
    y = jnp.dot(w2_ref[...], h, preferred_element_type=jnp.float32)
    out_ref[...] = (y + b2_ref[...]).astype(out_ref.dtype)    # lane-dense store


def prepare_params(w1, b1, w2, b2):
    """Hoist parameter layout glue out of the per-call path (done once).

    In the transposed (feature-major) compute, the PyTorch layouts are used
    directly:  h = W1 @ x^T + b1[:, None];  y = W2 @ h + b2[:, None].
    """
    return (
        jnp.asarray(w1, jnp.float32),            # (HIDDEN, N_STATES)
        jnp.asarray(b1, jnp.float32)[:, None],   # (HIDDEN, 1)
        jnp.asarray(w2, jnp.float32),            # (N_ACTIONS, HIDDEN)
        jnp.asarray(b2, jnp.float32)[:, None],   # (N_ACTIONS, 1)
    )


@jax.jit
def dqn_forward(x, params):
    """x: (B, N_STATES) f32. params: output of prepare_params(). -> (B, N_ACTIONS)."""
    w1, b1, w2, b2 = params
    B = x.shape[0]
    tb = _choose_tb(B)
    num_blocks = pl.cdiv(B, tb)

    # One-time dense relayout so the batch maps to lanes inside the kernel.
    # This single pass replaces the ~32x-inflated lane-sparse (tb, 4) DMAs of
    # the previous layout; no padding -- the ragged last block is masked.
    x_t = jnp.asarray(x, jnp.float32).T                       # (N_STATES, B)

    # Advisory cost hints (now accurate: the layout is lane-dense).
    flops = 2 * B * (N_STATES * HIDDEN + HIDDEN * N_ACTIONS)
    bytes_accessed = 4 * (
        B * (N_STATES + N_ACTIONS)
        + N_STATES * HIDDEN + HIDDEN + HIDDEN * N_ACTIONS + N_ACTIONS
    )

    out_t = pl.pallas_call(
        _dqn_kernel,
        out_shape=jax.ShapeDtypeStruct((N_ACTIONS, B), jnp.float32),
        grid=(num_blocks,),
        in_specs=[
            # x^T: tiled over batch on lanes, full feature extent on sublanes.
            pl.BlockSpec((N_STATES, tb), lambda i: (0, i)),
            # Weights / biases: constant index_map -> VMEM-resident across grid.
            pl.BlockSpec((HIDDEN, N_STATES), lambda i: (0, 0)),
            pl.BlockSpec((HIDDEN, 1), lambda i: (0, 0)),
            pl.BlockSpec((N_ACTIONS, HIDDEN), lambda i: (0, 0)),
            pl.BlockSpec((N_ACTIONS, 1), lambda i: (0, 0)),
        ],
        out_specs=pl.BlockSpec((N_ACTIONS, tb), lambda i: (0, i)),
        compiler_params=pltpu.CompilerParams(
            dimension_semantics=("parallel",),   # megacore sharding on v7x
        ),
        cost_estimate=pl.CostEstimate(
            flops=flops, transcendentals=0, bytes_accessed=bytes_accessed
        ),
    )(x_t, w1, b1, w2, b2)

    return out_t.T                                            # (B, N_ACTIONS)


def init_params(key):
    """Deterministic synthetic init matching the module's __init__:
    weights ~ N(0, 0.01); biases use PyTorch's default uniform(+-1/sqrt(fan_in))."""
    k1, k2, k3, k4 = jax.random.split(key, 4)
    w1 = 0.01 * jax.random.normal(k1, (HIDDEN, N_STATES), jnp.float32)
    b1 = jax.random.uniform(
        k2, (HIDDEN,), jnp.float32, -1.0 / jnp.sqrt(N_STATES), 1.0 / jnp.sqrt(N_STATES)
    )
    w2 = 0.01 * jax.random.normal(k3, (N_ACTIONS, HIDDEN), jnp.float32)
    b2 = jax.random.uniform(
        k4, (N_ACTIONS,), jnp.float32, -1.0 / jnp.sqrt(HIDDEN), 1.0 / jnp.sqrt(HIDDEN)
    )
    return w1, b1, w2, b2


def _reference(x, w1, b1, w2, b2):
    return jnp.maximum(x @ w1.T + b1, 0.0) @ w2.T + b2


if __name__ == "__main__":
    key = jax.random.PRNGKey(0)
    kx, kx2, kp = jax.random.split(key, 3)

    w1, b1, w2, b2 = init_params(kp)
    params = prepare_params(w1, b1, w2, b2)   # layout glue hoisted out of the hot path

    # Primary check: small batch consistent with the module (B=2, N_STATES=4).
    B = 2
    x = jax.random.normal(kx, (B, N_STATES), jnp.float32)
    actions_value = dqn_forward(x, params)
    jax.block_until_ready(actions_value)
    ref = _reference(x, w1, b1, w2, b2)
    assert actions_value.shape == (B, N_ACTIONS)
    assert jnp.allclose(actions_value, ref, atol=1e-5, rtol=1e-5)

    # Secondary check: multi-step grid + ragged (masked) last block.
    B2 = 2600
    x2 = jax.random.normal(kx2, (B2, N_STATES), jnp.float32)
    out2 = dqn_forward(x2, params)
    jax.block_until_ready(out2)
    ref2 = _reference(x2, w1, b1, w2, b2)
    assert out2.shape == (B2, N_ACTIONS)
    assert jnp.allclose(out2, ref2, atol=1e-5, rtol=1e-5)

    print("KERNEL_OK")
</pallas_src>

<mosaic_0001>
module attributes {stable_mosaic.version = 11 : i64} {
  func.func @_dqn_kernel(%arg0: i32, %arg1: memref<4x2xf32, #tpu.memory_space<vmem>>, %arg2: memref<50x4xf32, #tpu.memory_space<vmem>>, %arg3: memref<50x1xf32, #tpu.memory_space<vmem>>, %arg4: memref<2x50xf32, #tpu.memory_space<vmem>>, %arg5: memref<2x1xf32, #tpu.memory_space<vmem>>, %arg6: memref<2x2xf32, #tpu.memory_space<vmem>>) attributes {dimension_semantics = [#tpu.dimension_semantics<parallel>], iteration_bounds = array<i64: 1>, scalar_prefetch = 0 : i64, scratch_operands = 0 : i64, tpu.core_type = #tpu.core_type<tc>, window_params = [{transform_indices = @transform_0, window_bounds = array<i64: 4, 2>}, {pipeline_mode = #tpu.pipeline_mode<synchronous>, transform_indices = @transform_1, window_bounds = array<i64: 50, 4>}, {pipeline_mode = #tpu.pipeline_mode<synchronous>, transform_indices = @transform_2, window_bounds = array<i64: 50, 1>}, {pipeline_mode = #tpu.pipeline_mode<synchronous>, transform_indices = @transform_3, window_bounds = array<i64: 2, 50>}, {pipeline_mode = #tpu.pipeline_mode<synchronous>, transform_indices = @transform_4, window_bounds = array<i64: 2, 1>}, {transform_indices = @transform_5, window_bounds = array<i64: 2, 2>}]} {
    %c0 = arith.constant 0 : index
    %c0_0 = arith.constant 0 : index
    %0 = vector.load %arg1[%c0, %c0_0] : memref<4x2xf32, #tpu.memory_space<vmem>>, vector<4x2xf32>
    %c0_1 = arith.constant 0 : index
    %c0_2 = arith.constant 0 : index
    %1 = vector.load %arg2[%c0_1, %c0_2] : memref<50x4xf32, #tpu.memory_space<vmem>>, vector<50x4xf32>
    %c0_3 = arith.constant 0 : index
    %c0_4 = arith.constant 0 : index
    %2 = vector.load %arg3[%c0_3, %c0_4] : memref<50x1xf32, #tpu.memory_space<vmem>>, vector<50x1xf32>
    %3 = vector.shape_cast %2 : vector<50x1xf32> to vector<50x1xf32>
    %4 = vector.broadcast %3 : vector<50x1xf32> to vector<50x2xf32>
    %5 = vector.extract_strided_slice %1 {offsets = [0, 0], sizes = [50, 1], strides = [1, 1]} : vector<50x4xf32> to vector<50x1xf32>
    %6 = vector.extract_strided_slice %0 {offsets = [0, 0], sizes = [1, 2], strides = [1, 1]} : vector<4x2xf32> to vector<1x2xf32>
    %7 = vector.broadcast %5 : vector<50x1xf32> to vector<50x2xf32>
    %8 = vector.broadcast %6 : vector<1x2xf32> to vector<50x2xf32>
    %9 = arith.mulf %7, %8 : vector<50x2xf32>
    %10 = arith.addf %4, %9 : vector<50x2xf32>
    %11 = vector.extract_strided_slice %1 {offsets = [0, 1], sizes = [50, 1], strides = [1, 1]} : vector<50x4xf32> to vector<50x1xf32>
    %12 = vector.extract_strided_slice %0 {offsets = [1, 0], sizes = [1, 2], strides = [1, 1]} : vector<4x2xf32> to vector<1x2xf32>
    %13 = vector.broadcast %11 : vector<50x1xf32> to vector<50x2xf32>
    %14 = vector.broadcast %12 : vector<1x2xf32> to vector<50x2xf32>
    %15 = arith.mulf %13, %14 : vector<50x2xf32>
    %16 = arith.addf %10, %15 : vector<50x2xf32>
    %17 = vector.extract_strided_slice %1 {offsets = [0, 2], sizes = [50, 1], strides = [1, 1]} : vector<50x4xf32> to vector<50x1xf32>
    %18 = vector.extract_strided_slice %0 {offsets = [2, 0], sizes = [1, 2], strides = [1, 1]} : vector<4x2xf32> to vector<1x2xf32>
    %19 = vector.broadcast %17 : vector<50x1xf32> to vector<50x2xf32>
    %20 = vector.broadcast %18 : vector<1x2xf32> to vector<50x2xf32>
    %21 = arith.mulf %19, %20 : vector<50x2xf32>
    %22 = arith.addf %16, %21 : vector<50x2xf32>
    %23 = vector.extract_strided_slice %1 {offsets = [0, 3], sizes = [50, 1], strides = [1, 1]} : vector<50x4xf32> to vector<50x1xf32>
    %24 = vector.extract_strided_slice %0 {offsets = [3, 0], sizes = [1, 2], strides = [1, 1]} : vector<4x2xf32> to vector<1x2xf32>
    %25 = vector.broadcast %23 : vector<50x1xf32> to vector<50x2xf32>
    %26 = vector.broadcast %24 : vector<1x2xf32> to vector<50x2xf32>
    %27 = arith.mulf %25, %26 : vector<50x2xf32>
    %28 = arith.addf %22, %27 : vector<50x2xf32>
    %cst = arith.constant 0.000000e+00 : f32
    %29 = vector.broadcast %cst : f32 to vector<50x2xf32>
    %30 = arith.maximumf %28, %29 : vector<50x2xf32>
    %c0_5 = arith.constant 0 : index
    %c0_6 = arith.constant 0 : index
    %31 = vector.load %arg4[%c0_5, %c0_6] : memref<2x50xf32, #tpu.memory_space<vmem>>, vector<2x50xf32>
    %cst_7 = arith.constant dense<0.000000e+00> : vector<2x2xf32>
    %32 = tpu.matmul %31, %30, %cst_7 {dimension_numbers = #tpu.dot_dimension_numbers<[1], [0], [0], [1], [0, 0, 1, 1], [], []>} : vector<2x50xf32>, vector<50x2xf32>, vector<2x2xf32> -> vector<2x2xf32>
    %c0_8 = arith.constant 0 : index
    %c0_9 = arith.constant 0 : index
    %33 = vector.load %arg5[%c0_8, %c0_9] : memref<2x1xf32, #tpu.memory_space<vmem>>, vector<2x1xf32>
    %34 = vector.broadcast %33 : vector<2x1xf32> to vector<2x2xf32>
    %35 = arith.addf %32, %34 : vector<2x2xf32>
    %c0_10 = arith.constant 0 : index
    %c0_11 = arith.constant 0 : index
    %36 = vector.load %arg6[%c0_10, %c0_11] : memref<2x2xf32, #tpu.memory_space<vmem>>, vector<2x2xf32>
    tpu.vector_store %arg6[%c0_10, %c0_11], %35 {strides = array<i32>} : memref<2x2xf32, #tpu.memory_space<vmem>>, vector<2x2xf32>,
    return
  }
  func.func @transform_0(%arg0: i32) -> (i32, i32) {
    %c0_i32 = arith.constant 0 : i32
    %c0_i32_0 = arith.constant 0 : i32
    return %c0_i32, %arg0 : i32, i32
  }
  func.func @transform_1(%arg0: i32) -> (i32, i32) {
    %c0_i32 = arith.constant 0 : i32
    %c0_i32_0 = arith.constant 0 : i32
    %c0_i32_1 = arith.constant 0 : i32
    return %c0_i32, %c0_i32_0 : i32, i32
  }
  func.func @transform_2(%arg0: i32) -> (i32, i32) {
    %c0_i32 = arith.constant 0 : i32
    %c0_i32_0 = arith.constant 0 : i32
    %c0_i32_1 = arith.constant 0 : i32
    return %c0_i32, %c0_i32_0 : i32, i32
  }
  func.func @transform_3(%arg0: i32) -> (i32, i32) {
    %c0_i32 = arith.constant 0 : i32
    %c0_i32_0 = arith.constant 0 : i32
    %c0_i32_1 = arith.constant 0 : i32
    return %c0_i32, %c0_i32_0 : i32, i32
  }
  func.func @transform_4(%arg0: i32) -> (i32, i32) {
    %c0_i32 = arith.constant 0 : i32
    %c0_i32_0 = arith.constant 0 : i32
    %c0_i32_1 = arith.constant 0 : i32
    return %c0_i32, %c0_i32_0 : i32, i32
  }
  func.func @transform_5(%arg0: i32) -> (i32, i32) {
    %c0_i32 = arith.constant 0 : i32
    %c0_i32_0 = arith.constant 0 : i32
    return %c0_i32, %arg0 : i32, i32
  }
}

</mosaic_0001>

<llo_original>
// kernel: dqn_forward.1
$region0: #{dqn_forward.1}
  #allocation0 [shape = 'u32[]', space=smem, size = 0x4, offset = 0x4, fixed_abs, tag = 'smem constant byte address 0x4 - core index']
  #allocation1 [shape = 'u32[144,128]{1,0:T(1,128)}', space=vmem, size = 0x12000, scoped, tag = 'internal scratch']
  %s0 = inlined_call_operand.vmem [shape: f32[4,2], index: 0, kind: input, shape index: {}]
  %s1 = inlined_call_operand.vmem [shape: f32[50,4], index: 1, kind: input, shape index: {}]
  %s2 = inlined_call_operand.vmem [shape: f32[50,1], index: 2, kind: input, shape index: {}]
  %s3 = inlined_call_operand.vmem [shape: f32[2,50], index: 3, kind: input, shape index: {}]
  %s4 = inlined_call_operand.vmem [shape: f32[2,1], index: 4, kind: input, shape index: {}]
  %s5 = inlined_call_operand.vmem [shape: f32[2,2], index: 5, kind: output, shape index: {}]
  %s6 = sld [smem:[#allocation0]]
  $region30: #{dqn_forward.1} parent=0
    _
  %s8 = ssub.s32 1, %s6
  %s9 = scalar_select 0, %s8, %s6
  // Predicated region
  $region2: #{dqn_forward.1} parent=0 // pred_check
    _
  $region3: #{dqn_forward.1} parent=0 // pred_check_branch
    %11 = sbr.rel (0) target = $region5
  $region4: #{dqn_forward.1} parent=0 // pred_region
    _
  $region5: #{dqn_forward.1} parent=0 // pred_fallthru
    _
  // Predicated region
  $region6: #{dqn_forward.1} parent=0 // pred_check
    _
  $region7: #{dqn_forward.1} parent=0 // pred_check_branch
    %13 = sbr.rel (0) target = $region9
  $region8: #{dqn_forward.1} parent=0 // pred_region
    _
  $region9: #{dqn_forward.1} parent=0 // pred_fallthru
    _
  // Predicated region
  $region10: #{dqn_forward.1} parent=0 // pred_check
    _
  $region11: #{dqn_forward.1} parent=0 // pred_check_branch
    %15 = sbr.rel (0) target = $region13
  $region12: #{dqn_forward.1} parent=0 // pred_region
    _
  $region13: #{dqn_forward.1} parent=0 // pred_fallthru
    _
  // Predicated region
  $region14: #{dqn_forward.1} parent=0 // pred_check
    _
  $region15: #{dqn_forward.1} parent=0 // pred_check_branch
    %17 = sbr.rel (0) target = $region17
  $region16: #{dqn_forward.1} parent=0 // pred_region
    _
  $region17: #{dqn_forward.1} parent=0 // pred_fallthru
    _
  // Predicated region
  $region18: #{dqn_forward.1} parent=0 // pred_check
    _
  $region19: #{dqn_forward.1} parent=0 // pred_check_branch
    %19 = sbr.rel (0) target = $region21
  $region20: #{dqn_forward.1} parent=0 // pred_region
    _
  $region21: #{dqn_forward.1} parent=0 // pred_fallthru
    _
  %v20 = vld [vmem:[%s0] sm:$0xf]
  %v21 = vld [vmem:[%s1] sm:$0xff]
  %v22 = vld [vmem:[%s1 + $0x8] sm:$0xff]
  %v23 = vld [vmem:[%s1 + $0x10] sm:$0xff]
  %v24 = vld [vmem:[%s1 + $0x18] sm:$0xff]
  %v25 = vld [vmem:[%s1 + $0x20] sm:$0xff]
  %v26 = vld [vmem:[%s1 + $0x28] sm:$0xff]
  %v27 = vld [vmem:[%s1 + $0x30] sm:$0x3]
  %v28 = vld [vmem:[%s2] sm:$0xff]
  %v29 = vld [vmem:[%s2 + $0x8] sm:$0xff]
  %v30 = vld [vmem:[%s2 + $0x10] sm:$0xff]
  %v31 = vld [vmem:[%s2 + $0x18] sm:$0xff]
  %v32 = vld [vmem:[%s2 + $0x20] sm:$0xff]
  %v33 = vld [vmem:[%s2 + $0x28] sm:$0xff]
  %v34 = vld [vmem:[%s2 + $0x30] sm:$0x3]
  %36 = vset.pattern.permute.xlu0 0
  %37 = vperm.xlu0 %36, %v28
  %v38 = vpop.permute.xlu0 %37
  %41 = vset.pattern.permute.xlu0 0
  %42 = vperm.xlu0 %41, %v29
  %v43 = vpop.permute.xlu0 %42
  %46 = vset.pattern.permute.xlu0 0
  %47 = vperm.xlu0 %46, %v30
  %v48 = vpop.permute.xlu0 %47
  %51 = vset.pattern.permute.xlu0 0
  %52 = vperm.xlu0 %51, %v31
  %v53 = vpop.permute.xlu0 %52
  %56 = vset.pattern.permute.xlu0 0
  %57 = vperm.xlu0 %56, %v32
  %v58 = vpop.permute.xlu0 %57
  %61 = vset.pattern.permute.xlu0 0
  %62 = vperm.xlu0 %61, %v33
  %v63 = vpop.permute.xlu0 %62
  %66 = vset.pattern.permute.xlu0 0
  %67 = vperm.xlu0 %66, %v34
  %v68 = vpop.permute.xlu0 %67
  %71 = vset.pattern.permute.xlu0 0
  %72 = vperm.xlu0 %71, %v21
  %v73 = vpop.permute.xlu0 %72
  %76 = vset.pattern.permute.xlu0 0
  %77 = vperm.xlu0 %76, %v22
  %v78 = vpop.permute.xlu0 %77
  %81 = vset.pattern.permute.xlu0 0
  %82 = vperm.xlu0 %81, %v23
  %v83 = vpop.permute.xlu0 %82
  %86 = vset.pattern.permute.xlu0 0
  %87 = vperm.xlu0 %86, %v24
  %v88 = vpop.permute.xlu0 %87
  %91 = vset.pattern.permute.xlu0 0
  %92 = vperm.xlu0 %91, %v25
  %v93 = vpop.permute.xlu0 %92
  %96 = vset.pattern.permute.xlu0 0
  %97 = vperm.xlu0 %96, %v26
  %v98 = vpop.permute.xlu0 %97
  %101 = vset.pattern.permute.xlu0 0
  %102 = vperm.xlu0 %101, %v27
  %v103 = vpop.permute.xlu0 %102
  %v105 = vlaneseq
  %v106 = vshrl.u32 %v105, 7
  %v107 = vsub.s32 0, %v106
  %v108 = vrot.slane %v20, %v107
  %v109 = vmul.f32 %v73, %v108
  %v110 = vmul.f32 %v78, %v108
  %v111 = vmul.f32 %v83, %v108
  %v112 = vmul.f32 %v88, %v108
  %v113 = vmul.f32 %v93, %v108
  %v114 = vmul.f32 %v98, %v108
  %v115 = vmul.f32 %v103, %v108
  %v116 = vadd.f32 %v38, %v109
  %v117 = vadd.f32 %v43, %v110
  %v118 = vadd.f32 %v48, %v111
  %v119 = vadd.f32 %v53, %v112
  %v120 = vadd.f32 %v58, %v113
  %v121 = vadd.f32 %v63, %v114
  %v122 = vadd.f32 %v68, %v115
  %123 = vset.pattern.permute.xlu0 1
  %124 = vperm.xlu0 %123, %v21
  %v125 = vpop.permute.xlu0 %124
  %127 = vset.pattern.permute.xlu0 1
  %128 = vperm.xlu0 %127, %v22
  %v129 = vpop.permute.xlu0 %128
  %131 = vset.pattern.permute.xlu0 1
  %132 = vperm.xlu0 %131, %v23
  %v133 = vpop.permute.xlu0 %132
  %135 = vset.pattern.permute.xlu0 1
  %136 = vperm.xlu0 %135, %v24
  %v137 = vpop.permute.xlu0 %136
  %139 = vset.pattern.permute.xlu0 1
  %140 = vperm.xlu0 %139, %v25
  %v141 = vpop.permute.xlu0 %140
  %143 = vset.pattern.permute.xlu0 1
  %144 = vperm.xlu0 %143, %v26
  %v145 = vpop.permute.xlu0 %144
  %147 = vset.pattern.permute.xlu0 1
  %148 = vperm.xlu0 %147, %v27
  %v149 = vpop.permute.xlu0 %148
  %v151 = vlaneseq
  %v152 = vshrl.u32 %v151, 7
  %v153 = vsub.s32 1, %v152
  %v154 = vrot.slane %v20, %v153
  %v155 = vmul.f32 %v125, %v154
  %v156 = vmul.f32 %v129, %v154
  %v157 = vmul.f32 %v133, %v154
  %v158 = vmul.f32 %v137, %v154
  %v159 = vmul.f32 %v141, %v154
  %v160 = vmul.f32 %v145, %v154
  %v161 = vmul.f32 %v149, %v154
  %v162 = vadd.f32 %v116, %v155
  %v163 = vadd.f32 %v117, %v156
  %v164 = vadd.f32 %v118, %v157
  %v165 = vadd.f32 %v119, %v158
  %v166 = vadd.f32 %v120, %v159
  %v167 = vadd.f32 %v121, %v160
  %v168 = vadd.f32 %v122, %v161
  %169 = vset.pattern.permute.xlu0 2
  %170 = vperm.xlu0 %169, %v21
  %v171 = vpop.permute.xlu0 %170
  %173 = vset.pattern.permute.xlu0 2
  %174 = vperm.xlu0 %173, %v22
  %v175 = vpop.permute.xlu0 %174
  %177 = vset.pattern.permute.xlu0 2
  %178 = vperm.xlu0 %177, %v23
  %v179 = vpop.permute.xlu0 %178
  %181 = vset.pattern.permute.xlu0 2
  %182 = vperm.xlu0 %181, %v24
  %v183 = vpop.permute.xlu0 %182
  %185 = vset.pattern.permute.xlu0 2
  %186 = vperm.xlu0 %185, %v25
  %v187 = vpop.permute.xlu0 %186
  %189 = vset.pattern.permute.xlu0 2
  %190 = vperm.xlu0 %189, %v26
  %v191 = vpop.permute.xlu0 %190
  %193 = vset.pattern.permute.xlu0 2
  %194 = vperm.xlu0 %193, %v27
  %v195 = vpop.permute.xlu0 %194
  %v197 = vlaneseq
  %v198 = vshrl.u32 %v197, 7
  %v199 = vsub.s32 2, %v198
  %v200 = vrot.slane %v20, %v199
  %v201 = vmul.f32 %v171, %v200
  %v202 = vmul.f32 %v175, %v200
  %v203 = vmul.f32 %v179, %v200
  %v204 = vmul.f32 %v183, %v200
  %v205 = vmul.f32 %v187, %v200
  %v206 = vmul.f32 %v191, %v200
  %v207 = vmul.f32 %v195, %v200
  %v208 = vadd.f32 %v162, %v201
  %v209 = vadd.f32 %v163, %v202
  %v210 = vadd.f32 %v164, %v203
  %v211 = vadd.f32 %v165, %v204
  %v212 = vadd.f32 %v166, %v205
  %v213 = vadd.f32 %v167, %v206
  %v214 = vadd.f32 %v168, %v207
  %215 = vset.pattern.permute.xlu0 3
  %216 = vperm.xlu0 %215, %v21
  %v217 = vpop.permute.xlu0 %216
  %219 = vset.pattern.permute.xlu0 3
  %220 = vperm.xlu0 %219, %v22
  %v221 = vpop.permute.xlu0 %220
  %223 = vset.pattern.permute.xlu0 3
  %224 = vperm.xlu0 %223, %v23
  %v225 = vpop.permute.xlu0 %224
  %227 = vset.pattern.permute.xlu0 3
  %228 = vperm.xlu0 %227, %v24
  %v229 = vpop.permute.xlu0 %228
  %231 = vset.pattern.permute.xlu0 3
  %232 = vperm.xlu0 %231, %v25
  %v233 = vpop.permute.xlu0 %232
  %235 = vset.pattern.permute.xlu0 3
  %236 = vperm.xlu0 %235, %v26
  %v237 = vpop.permute.xlu0 %236
  %239 = vset.pattern.permute.xlu0 3
  %240 = vperm.xlu0 %239, %v27
  %v241 = vpop.permute.xlu0 %240
  %v243 = vlaneseq
  %v244 = vshrl.u32 %v243, 7
  %v245 = vsub.s32 3, %v244
  %v246 = vrot.slane %v20, %v245
  %v247 = vmul.f32 %v217, %v246
  %v248 = vmul.f32 %v221, %v246
  %v249 = vmul.f32 %v225, %v246
  %v250 = vmul.f32 %v229, %v246
  %v251 = vmul.f32 %v233, %v246
  %v252 = vmul.f32 %v237, %v246
  %v253 = vmul.f32 %v241, %v246
  %v254 = vadd.f32 %v208, %v247
  %v255 = vadd.f32 %v209, %v248
  %v256 = vadd.f32 %v210, %v249
  %v257 = vadd.f32 %v211, %v250
  %v258 = vadd.f32 %v212, %v251
  %v259 = vadd.f32 %v213, %v252
  %v260 = vadd.f32 %v214, %v253
  %v261 = vmax.f32 %v254, 0.0
  %v262 = vmax.f32 %v255, 0.0
  %v263 = vmax.f32 %v256, 0.0
  %v264 = vmax.f32 %v257, 0.0
  %v265 = vmax.f32 %v258, 0.0
  %v266 = vmax.f32 %v259, 0.0
  %v267 = vmax.f32 %v260, 0.0
  %v268 = vld [vmem:[%s3] sm:$0x3]
  %v269 = vld [vmem:[%s4] sm:$0x3]
  %271 = vset.pattern.permute.xlu0 0
  %272 = vperm.xlu0 %271, %v269
  %v273 = vpop.permute.xlu0 %272
  %vm275 = vcmask 408576
  %v277 = vsel %vm275, %v268, 0
  %vm279 = vcmask 1041408
  %v281 = vsel %vm279, %v267, 0
  %283 = vmatprep.subr.mxu0 0.0
  %284 = vmatpush1.msra.mxu0 %v261
  %285 = vmatprep.subr.mxu0 0.0
  %286 = vmatpush1.msra.mxu0 %v262
  %287 = vmatprep.subr.mxu0 0.0
  %288 = vmatpush1.msra.mxu0 %v263
  %289 = vmatprep.subr.mxu0 0.0
  %290 = vmatpush1.msra.mxu0 %v264
  %291 = vmatprep.subr.mxu0 0.0
  %292 = vmatpush1.msra.mxu0 %v265
  %293 = vmatprep.subr.mxu0 0.0
  %294 = vmatpush1.msra.mxu0 %v266
  %295 = vmatprep.subr.mxu0 0.0
  %296 = vmatpush1.msra.mxu0 %v281
  %297 = vmatprep.subr.mxu0 0.0
  %298 = vmatpush1.msra.mxu0 0.0
  %299 = vmatprep.subr.mxu0 0.0
  %300 = vmatpush1.msra.mxu0 0.0
  %301 = vmatprep.subr.mxu0 0.0
  %302 = vmatpush1.msra.mxu0 0.0
  %303 = vmatprep.subr.mxu0 0.0
  %304 = vmatpush1.msra.mxu0 0.0
  %305 = vmatprep.subr.mxu0 0.0
  %306 = vmatpush1.msra.mxu0 0.0
  %307 = vmatprep.subr.mxu0 0.0
  %308 = vmatpush1.msra.mxu0 0.0
  %309 = vmatprep.subr.mxu0 0.0
  %310 = vmatpush1.msra.mxu0 0.0
  %311 = vmatprep.subr.mxu0 0.0
  %312 = vmatpush1.msra.mxu0 0.0
  %313 = vmatprep.subr.mxu0 0.0
  %314 = vmatpush1.msra.mxu0 0.0
  %315 = vmatprep.subr.mxu0 0.0
  %316 = vmatpush1.msra.mxu0 0.0
  %317 = vmatprep.subr.mxu0 0.0
  %318 = vmatpush1.msra.mxu0 0.0
  %319 = vmatprep.subr.mxu0 0.0
  %320 = vmatpush1.msra.mxu0 0.0
  %321 = vmatprep.subr.mxu0 0.0
  %322 = vmatpush1.msra.mxu0 0.0
  %323 = vmatprep.subr.mxu0 0.0
  %324 = vmatpush1.msra.mxu0 0.0
  %325 = vmatprep.subr.mxu0 0.0
  %326 = vmatpush1.msra.mxu0 0.0
  %327 = vmatprep.subr.mxu0 0.0
  %328 = vmatpush1.msra.mxu0 0.0
  %329 = vmatprep.subr.mxu0 0.0
  %330 = vmatpush1.msra.mxu0 0.0
  %331 = vmatprep.subr.mxu0 0.0
  %332 = vmatpush1.msra.mxu0 0.0
  %333 = vmatprep.subr.mxu0 0.0
  %334 = vmatpush1.msra.mxu0 0.0
  %335 = vmatprep.subr.mxu0 0.0
  %336 = vmatpush1.msra.mxu0 0.0
  %337 = vmatprep.subr.mxu0 0.0
  %338 = vmatpush1.msra.mxu0 0.0
  %339 = vmatprep.subr.mxu0 0.0
  %340 = vmatpush1.msra.mxu0 0.0
  %341 = vmatprep.subr.mxu0 0.0
  %342 = vmatpush1.msra.mxu0 0.0
  %343 = vmatprep.subr.mxu0 0.0
  %344 = vmatpush1.msra.mxu0 0.0
  %345 = vmatprep.subr.mxu0 0.0
  %346 = vmatpush1.msra.mxu0 0.0
  %347 = vmatprep.mubr.f32.mxu0 0.0
  %348 = vmatmul.mubr.f32.gmra.mrb[0].mxu0 %v277
  %v349 = vpop.f32.mrb[0].mxu0
  %v350 = vadd.f32 %v273, %v349
  %v351 = vpop.f32.mrb[0].mxu0
  %352 = vdwg.mxu0
  %vm353 = vcmask 9216
  %354 = vst.msk [vmem:[%s5] sm:$0x3] %vm353, %v350
  // Predicated region
  $region22: #{dqn_forward.1} parent=0 // pred_check
    _
  $region23: #{dqn_forward.1} parent=0 // pred_check_branch
    %356 = sbr.rel (0) target = $region25
  $region24: #{dqn_forward.1} parent=0 // pred_region
    _
  $region25: #{dqn_forward.1} parent=0 // pred_fallthru
    _
  // Predicated region
  $region26: #{dqn_forward.1} parent=0 // pred_check
    _
  $region27: #{dqn_forward.1} parent=0 // pred_check_branch
    %358 = sbr.rel (0) target = $region29
  $region28: #{dqn_forward.1} parent=0 // pred_region
    _
  $region29: #{dqn_forward.1} parent=0 // pred_fallthru
    _

</llo_original>
